<compile_context>
chip_gen: v5e
topology: v5e:2x2
jax: 0.10.0
libtpu: 0.0.40
codegen_flags: <defaults>
</compile_context>

<pallas_src>
import functools

import numpy as np
import jax
import jax.numpy as jnp
from jax import lax
from jax.experimental import pallas as pl
from jax.experimental.pallas import tpu as pltpu

NEG_BIG = -9.0e15
BN_EPS = 1e-5
ALPHA = 0.2  # LeakyReLU negative slope
BN_SCALE2 = 1.0 / (1.0 + BN_EPS)  # (rsqrt(1+eps))^2, bn1*bn2 folded into h_prime


def _leaky_relu(x, slope=ALPHA):
    return jnp.where(x > 0, x, slope * x)


def _mm(x, y, dx, dy):
    """2-D dot_general contracting x-dim dx with y-dim dy, f32 accumulation."""
    return lax.dot_general(x, y, (((dx,), (dy,)), ((), ())),
                           preferred_element_type=jnp.float32)


def ours_kernel(F_out, B, src_ref, sinput_ref, rinput_ref, w_ref,
                inter_adj_ref, city_ref, prov_ref, out_ref):
    N, M = inter_adj_ref.shape
    C2 = F_out + 3  # width of the W2-augmented block

    sinput = sinput_ref[...]        # (N, F_in)
    rinput = rinput_ref[...]        # (M, F_in)
    w_aug = w_ref[...]              # (F_in, 2F+4): [W2 | W2@a_bot | W2@a3s | W2@a4s | W1 | W1@a_top]
    inter_adj = inter_adj_ref[...]  # (N, M)
    city_adj = city_ref[...]        # (N, N)
    prov_adj = prov_ref[...]        # (N, N)

    # ---- one-hot(source_index) built in-kernel from SMEM scalars ------------
    row_iota = lax.broadcasted_iota(jnp.int32, (B, N), 0)
    col_iota = lax.broadcasted_iota(jnp.int32, (B, N), 1)
    onehot = jnp.zeros((B, N), jnp.float32)
    for b in range(B):  # B is a small static constant -> fully unrolled
        onehot = jnp.where((row_iota == b) & (col_iota == src_ref[b]),
                           1.0, onehot)

    # ---- merged projection: [Sinput ; Rinput] @ [W2_aug | W1_aug] ----------
    lhs = jnp.concatenate([sinput, rinput], axis=0)           # (N+M, F_in), 8-aligned pieces
    hh = _mm(lhs, w_aug, 1, 0)                                # (N+M, 2F+4)

    h2_aug = hh[:N, :C2]                                      # (N, F_out+3)
    h2 = h2_aug[:, :F_out]                                    # (N, F_out)
    p2_col = h2_aug[:, F_out:F_out + 1]                       # (N, 1) == h2 @ a[F:]

    h1_aug = hh[N:, C2:]                                      # (M, F_out+1)
    h1 = h1_aug[:, :F_out]                                    # (M, F_out)
    p1_row = jnp.transpose(h1_aug[:, F_out:F_out + 1])        # (1, M) == (h1 @ a[:F]).T

    # ---- row gathers via the in-kernel one-hot (rows are exact 0/1) --------
    h2_sel_aug = _mm(onehot, h2_aug, 1, 0)                    # (B, F_out+3) == h2_aug[source_index]
    city_sel = _mm(onehot, city_adj, 1, 0)                    # (B, N) == city_adj[source_index]
    prov_sel = _mm(onehot, prov_adj, 1, 0)                    # (B, N) == province_adj[source_index]

    h2_sel = h2_sel_aug[:, :F_out]                            # (B, F_out)
    exp_e3 = jnp.exp(_leaky_relu(h2_sel_aug[:, F_out + 1:F_out + 2]))  # (B, 1)
    exp_e4 = jnp.exp(_leaky_relu(h2_sel_aug[:, F_out + 2:F_out + 3]))  # (B, 1)

    # ---- inter attention (row-wise softmax over M, lane axis) --------------
    e12 = _leaky_relu(p2_col + p1_row)                        # (N, M)
    att = jnp.where(inter_adj > 0, e12, NEG_BIG)
    att = jnp.exp(att - jnp.max(att, axis=1, keepdims=True))
    denom = jnp.sum(att, axis=1, keepdims=True)
    att_inter = att * pl.reciprocal(denom, approx=True)       # (N, M)
    # (dropout: identity in eval mode)

    # ---- intra attention ----------------------------------------------------
    # exp(where(adj>0, e, -9e15)) == where(adj>0, exp(e), 0) in f32.
    exp_att3 = jnp.where(city_sel > 0, exp_e3, 0.0)           # (B, N)
    exp_att4 = jnp.where(prov_sel > 0, exp_e4, 0.0)           # (B, N)
    inter_sel = _mm(onehot, att_inter, 1, 0)                  # (B, M) == att_inter[source_index]
    sum_county = (jnp.sum(exp_att3, axis=1, keepdims=True)
                  + jnp.sum(exp_att4, axis=1, keepdims=True)
                  + jnp.sum(jnp.exp(inter_sel), axis=1, keepdims=True))  # (B, 1)
    att34 = (exp_att3 + exp_att4) * pl.reciprocal(sum_county, approx=True)  # (B, N)

    # ---- aggregation (bn eval-scale folded out; applied as s^2 on h_prime) --
    inter_rc = _mm(att_inter, h1, 1, 0)                       # (N, F_out)
    intra_nc = _mm(jnp.transpose(att34), h2_sel, 1, 0)        # (N, F_out)
    u_out = _leaky_relu(inter_rc + intra_nc)                  # (N, F_out)
    v_t = _leaky_relu(_mm(jnp.transpose(h2), att_inter, 1, 0))  # (F_out, M) == v_output.T / s

    h_prime = _mm(u_out, v_t, 1, 0) * jnp.float32(BN_SCALE2)  # (N, M)
    # ELU (alpha=1); min() avoids inf in the unused branch for large positives.
    out_ref[...] = jnp.where(h_prime > 0, h_prime,
                             jnp.exp(jnp.minimum(h_prime, 0.0)) - 1.0)


def prepare_params(params):
    """One-time parameter augmentation (runs at init, NOT per forward call)."""
    W1 = jnp.asarray(params["W1"], jnp.float32)
    W2 = jnp.asarray(params["W2"], jnp.float32)
    a = jnp.asarray(params["a"], jnp.float32)
    a3 = jnp.asarray(params["a3"], jnp.float32)
    a4 = jnp.asarray(params["a4"], jnp.float32)
    F_out = W1.shape[1]
    w2_aug = jnp.concatenate(
        [W2,
         W2 @ a[F_out:],
         W2 @ (a3[:F_out] + a3[F_out:]),
         W2 @ (a4[:F_out] + a4[F_out:])], axis=1)             # (F_in, F_out+3)
    w1_aug = jnp.concatenate([W1, W1 @ a[:F_out]], axis=1)    # (F_in, F_out+1)
    w_aug = jnp.concatenate([w2_aug, w1_aug], axis=1)         # (F_in, 2*F_out+4)
    return {"w_aug": jax.device_put(w_aug), "F_out": int(F_out)}


@functools.partial(jax.jit, static_argnames=("F_out",))
def ours_layer_forward(Sinput, Rinput, inter_adj, city_adj, province_adj,
                       source_index, w_aug, *, F_out):
    N, M = inter_adj.shape
    B = int(source_index.shape[0])
    F_in = Sinput.shape[1]
    src = source_index.astype(jnp.int32)

    # Advisory cost estimate for XLA's scheduler around the custom call.
    flops = 2 * ((N + M) * F_in * (2 * F_out + 4)        # merged projection
                 + B * N * ((F_out + 3) + 2 * N + M)     # one-hot gathers
                 + 3 * N * M * F_out + N * B * F_out)    # attention aggregation
    transcendentals = 2 * N * M + B * M + 2 * B
    bytes_accessed = 4 * ((N + M) * F_in + F_in * (2 * F_out + 4)
                          + 2 * N * M + 2 * N * N + B)

    vmem = pl.BlockSpec(memory_space=pltpu.MemorySpace.VMEM)
    smem = pl.BlockSpec(memory_space=pltpu.MemorySpace.SMEM)
    return pl.pallas_call(
        functools.partial(ours_kernel, F_out, B),
        out_shape=jax.ShapeDtypeStruct((N, M), jnp.float32),
        in_specs=[smem, vmem, vmem, vmem, vmem, vmem, vmem],
        out_specs=vmem,
        cost_estimate=pl.CostEstimate(flops=flops,
                                      transcendentals=transcendentals,
                                      bytes_accessed=bytes_accessed),
    )(src, Sinput, Rinput, w_aug, inter_adj, city_adj, province_adj)


def ours_layer_ref(Sinput, Rinput, inter_adj, city_adj, province_adj,
                   source_index, params):
    """Pure-JAX reference, line-by-line port of the PyTorch forward (eval mode)."""
    W1, W2, a, a3, a4 = (params["W1"], params["W2"], params["a"],
                         params["a3"], params["a4"])
    F_out = W1.shape[1]
    h1 = Rinput @ W1
    h2 = Sinput @ W2
    N, M = inter_adj.shape
    B = source_index.shape[0]
    h2_ = h2[source_index]
    inter_input = jnp.concatenate(
        [jnp.broadcast_to(h1[None, :, :], (N, M, F_out)),
         jnp.broadcast_to(h2[:, None, :], (N, M, F_out))], axis=2)
    e12 = jax.nn.leaky_relu((inter_input @ a)[..., 0], 0.2)
    att_inter = jnp.where(inter_adj > 0, e12, NEG_BIG)
    att_inter = jax.nn.softmax(att_inter, axis=1)
    rep3 = jnp.broadcast_to(h2_[:, None, :], (B, N, F_out))
    e3 = jax.nn.leaky_relu((jnp.concatenate([rep3, rep3], 2) @ a3)[..., 0], 0.2)
    e4 = jax.nn.leaky_relu((jnp.concatenate([rep3, rep3], 2) @ a4)[..., 0], 0.2)
    att3 = jnp.where(city_adj[source_index] > 0, e3, NEG_BIG)
    att4 = jnp.where(province_adj[source_index] > 0, e4, NEG_BIG)
    SUM = (jnp.sum(jnp.exp(att3), 1, keepdims=True)
           + jnp.sum(jnp.exp(att4), 1, keepdims=True)
           + jnp.sum(jnp.exp(att_inter[source_index]), 1, keepdims=True))
    att3 = jnp.exp(att3) / SUM
    att4 = jnp.exp(att4) / SUM
    InterRC = att_inter @ h1
    IntraNC = att3.T @ h2_ + att4.T @ h2_
    bn_scale = 1.0 / np.sqrt(1.0 + BN_EPS)
    v_output = jax.nn.leaky_relu((att_inter.T @ h2) * bn_scale, 0.2)
    u_output = jax.nn.leaky_relu((InterRC + IntraNC) * bn_scale, 0.2)
    h_prime = u_output @ v_output.T
    return jnp.where(h_prime > 0, h_prime, jnp.exp(jnp.minimum(h_prime, 0.0)) - 1.0)


if __name__ == "__main__":
    in_features, out_features = 32, 16
    N, M, B = 16, 24, 8
    dropout = 0.5  # eval mode -> no-op

    key = jax.random.PRNGKey(0)
    ks = jax.random.split(key, 10)

    def xavier(k, shape, gain=1.414):
        fan_out, fan_in = shape[0], shape[1]
        bound = gain * np.sqrt(6.0 / (fan_in + fan_out))
        return jax.random.uniform(k, shape, jnp.float32, -bound, bound)

    params = {
        "W1": xavier(ks[0], (in_features, out_features)),
        "W2": xavier(ks[1], (in_features, out_features)),
        "a":  xavier(ks[2], (2 * out_features, 1)),
        "a3": xavier(ks[3], (2 * out_features, 1)),
        "a4": xavier(ks[4], (2 * out_features, 1)),
    }

    Sinput = jax.random.normal(ks[5], (N, in_features), jnp.float32)
    Rinput = jax.random.normal(ks[6], (M, in_features), jnp.float32)
    inter_adj = (jax.random.uniform(ks[7], (N, M)) > 0.4).astype(jnp.float32)
    city_adj = (jax.random.uniform(ks[8], (N, N)) > 0.4).astype(jnp.float32)
    province_adj = (jax.random.uniform(ks[9], (N, N)) > 0.4).astype(jnp.float32)
    source_index = jnp.array([0, 2, 3, 5, 7, 9, 12, 15], dtype=jnp.int32)

    # One-time parameter prep (outside the per-call hot path).
    prepared = prepare_params(params)
    prepared["w_aug"] = jax.block_until_ready(prepared["w_aug"])

    out = ours_layer_forward(Sinput, Rinput, inter_adj, city_adj, province_adj,
                             source_index, prepared["w_aug"],
                             F_out=prepared["F_out"])
    out = jax.block_until_ready(out)

    ref = ours_layer_ref(Sinput, Rinput, inter_adj, city_adj, province_adj,
                         source_index, params)
    np.testing.assert_allclose(np.asarray(out), np.asarray(ref),
                               rtol=1e-2, atol=1e-2)
    print("KERNEL_OK")
</pallas_src>

<mosaic_0001>
module attributes {stable_mosaic.version = 11 : i64} {
  func.func @ours_kernel(%arg0: memref<8xi32, #tpu.memory_space<smem>>, %arg1: memref<16x32xf32, #tpu.memory_space<vmem>>, %arg2: memref<24x32xf32, #tpu.memory_space<vmem>>, %arg3: memref<32x36xf32, #tpu.memory_space<vmem>>, %arg4: memref<16x24xf32, #tpu.memory_space<vmem>>, %arg5: memref<16x16xf32, #tpu.memory_space<vmem>>, %arg6: memref<16x16xf32, #tpu.memory_space<vmem>>, %arg7: memref<16x24xf32, #tpu.memory_space<vmem>>) attributes {dimension_semantics = [], scalar_prefetch = 0 : i64, scratch_operands = 0 : i64, tpu.core_type = #tpu.core_type<tc>} {
    %c0 = arith.constant 0 : index
    %c0_0 = arith.constant 0 : index
    %0 = vector.load %arg1[%c0, %c0_0] : memref<16x32xf32, #tpu.memory_space<vmem>>, vector<16x32xf32>
    %c0_1 = arith.constant 0 : index
    %c0_2 = arith.constant 0 : index
    %1 = vector.load %arg2[%c0_1, %c0_2] : memref<24x32xf32, #tpu.memory_space<vmem>>, vector<24x32xf32>
    %c0_3 = arith.constant 0 : index
    %c0_4 = arith.constant 0 : index
    %2 = vector.load %arg3[%c0_3, %c0_4] : memref<32x36xf32, #tpu.memory_space<vmem>>, vector<32x36xf32>
    %c0_5 = arith.constant 0 : index
    %c0_6 = arith.constant 0 : index
    %3 = vector.load %arg4[%c0_5, %c0_6] : memref<16x24xf32, #tpu.memory_space<vmem>>, vector<16x24xf32>
    %c0_7 = arith.constant 0 : index
    %c0_8 = arith.constant 0 : index
    %4 = vector.load %arg5[%c0_7, %c0_8] : memref<16x16xf32, #tpu.memory_space<vmem>>, vector<16x16xf32>
    %c0_9 = arith.constant 0 : index
    %c0_10 = arith.constant 0 : index
    %5 = vector.load %arg6[%c0_9, %c0_10] : memref<16x16xf32, #tpu.memory_space<vmem>>, vector<16x16xf32>
    %6 = tpu.iota {dimensions = array<i32: 0>} : vector<8x16xi32>
    %7 = tpu.iota {dimensions = array<i32: 1>} : vector<8x16xi32>
    %cst = arith.constant 0.000000e+00 : f32
    %8 = vector.broadcast %cst : f32 to vector<8x16xf32>
    %c0_i32 = arith.constant 0 : i32
    %9 = vector.broadcast %c0_i32 : i32 to vector<8x16xi32>
    %10 = arith.cmpi eq, %6, %9 : vector<8x16xi32>
    %c0_11 = arith.constant 0 : index
    %11 = memref.load %arg0[%c0_11] : memref<8xi32, #tpu.memory_space<smem>>
    %12 = vector.broadcast %11 : i32 to vector<8x16xi32>
    %13 = arith.cmpi eq, %7, %12 : vector<8x16xi32>
    %14 = arith.andi %10, %13 : vector<8x16xi1>
    %cst_12 = arith.constant 1.000000e+00 : f32
    %15 = vector.broadcast %cst_12 : f32 to vector<8x16xf32>
    %16 = arith.select %14, %15, %8 : vector<8x16xi1>, vector<8x16xf32>
    %c1_i32 = arith.constant 1 : i32
    %17 = vector.broadcast %c1_i32 : i32 to vector<8x16xi32>
    %18 = arith.cmpi eq, %6, %17 : vector<8x16xi32>
    %c1 = arith.constant 1 : index
    %19 = memref.load %arg0[%c1] : memref<8xi32, #tpu.memory_space<smem>>
    %20 = vector.broadcast %19 : i32 to vector<8x16xi32>
    %21 = arith.cmpi eq, %7, %20 : vector<8x16xi32>
    %22 = arith.andi %18, %21 : vector<8x16xi1>
    %cst_13 = arith.constant 1.000000e+00 : f32
    %23 = vector.broadcast %cst_13 : f32 to vector<8x16xf32>
    %24 = arith.select %22, %23, %16 : vector<8x16xi1>, vector<8x16xf32>
    %c2_i32 = arith.constant 2 : i32
    %25 = vector.broadcast %c2_i32 : i32 to vector<8x16xi32>
    %26 = arith.cmpi eq, %6, %25 : vector<8x16xi32>
    %c2 = arith.constant 2 : index
    %27 = memref.load %arg0[%c2] : memref<8xi32, #tpu.memory_space<smem>>
    %28 = vector.broadcast %27 : i32 to vector<8x16xi32>
    %29 = arith.cmpi eq, %7, %28 : vector<8x16xi32>
    %30 = arith.andi %26, %29 : vector<8x16xi1>
    %cst_14 = arith.constant 1.000000e+00 : f32
    %31 = vector.broadcast %cst_14 : f32 to vector<8x16xf32>
    %32 = arith.select %30, %31, %24 : vector<8x16xi1>, vector<8x16xf32>
    %c3_i32 = arith.constant 3 : i32
    %33 = vector.broadcast %c3_i32 : i32 to vector<8x16xi32>
    %34 = arith.cmpi eq, %6, %33 : vector<8x16xi32>
    %c3 = arith.constant 3 : index
    %35 = memref.load %arg0[%c3] : memref<8xi32, #tpu.memory_space<smem>>
    %36 = vector.broadcast %35 : i32 to vector<8x16xi32>
    %37 = arith.cmpi eq, %7, %36 : vector<8x16xi32>
    %38 = arith.andi %34, %37 : vector<8x16xi1>
    %cst_15 = arith.constant 1.000000e+00 : f32
    %39 = vector.broadcast %cst_15 : f32 to vector<8x16xf32>
    %40 = arith.select %38, %39, %32 : vector<8x16xi1>, vector<8x16xf32>
    %c4_i32 = arith.constant 4 : i32
    %41 = vector.broadcast %c4_i32 : i32 to vector<8x16xi32>
    %42 = arith.cmpi eq, %6, %41 : vector<8x16xi32>
    %c4 = arith.constant 4 : index
    %43 = memref.load %arg0[%c4] : memref<8xi32, #tpu.memory_space<smem>>
    %44 = vector.broadcast %43 : i32 to vector<8x16xi32>
    %45 = arith.cmpi eq, %7, %44 : vector<8x16xi32>
    %46 = arith.andi %42, %45 : vector<8x16xi1>
    %cst_16 = arith.constant 1.000000e+00 : f32
    %47 = vector.broadcast %cst_16 : f32 to vector<8x16xf32>
    %48 = arith.select %46, %47, %40 : vector<8x16xi1>, vector<8x16xf32>
    %c5_i32 = arith.constant 5 : i32
    %49 = vector.broadcast %c5_i32 : i32 to vector<8x16xi32>
    %50 = arith.cmpi eq, %6, %49 : vector<8x16xi32>
    %c5 = arith.constant 5 : index
    %51 = memref.load %arg0[%c5] : memref<8xi32, #tpu.memory_space<smem>>
    %52 = vector.broadcast %51 : i32 to vector<8x16xi32>
    %53 = arith.cmpi eq, %7, %52 : vector<8x16xi32>
    %54 = arith.andi %50, %53 : vector<8x16xi1>
    %cst_17 = arith.constant 1.000000e+00 : f32
    %55 = vector.broadcast %cst_17 : f32 to vector<8x16xf32>
    %56 = arith.select %54, %55, %48 : vector<8x16xi1>, vector<8x16xf32>
    %c6_i32 = arith.constant 6 : i32
    %57 = vector.broadcast %c6_i32 : i32 to vector<8x16xi32>
    %58 = arith.cmpi eq, %6, %57 : vector<8x16xi32>
    %c6 = arith.constant 6 : index
    %59 = memref.load %arg0[%c6] : memref<8xi32, #tpu.memory_space<smem>>
    %60 = vector.broadcast %59 : i32 to vector<8x16xi32>
    %61 = arith.cmpi eq, %7, %60 : vector<8x16xi32>
    %62 = arith.andi %58, %61 : vector<8x16xi1>
    %cst_18 = arith.constant 1.000000e+00 : f32
    %63 = vector.broadcast %cst_18 : f32 to vector<8x16xf32>
    %64 = arith.select %62, %63, %56 : vector<8x16xi1>, vector<8x16xf32>
    %c7_i32 = arith.constant 7 : i32
    %65 = vector.broadcast %c7_i32 : i32 to vector<8x16xi32>
    %66 = arith.cmpi eq, %6, %65 : vector<8x16xi32>
    %c7 = arith.constant 7 : index
    %67 = memref.load %arg0[%c7] : memref<8xi32, #tpu.memory_space<smem>>
    %68 = vector.broadcast %67 : i32 to vector<8x16xi32>
    %69 = arith.cmpi eq, %7, %68 : vector<8x16xi32>
    %70 = arith.andi %66, %69 : vector<8x16xi1>
    %cst_19 = arith.constant 1.000000e+00 : f32
    %71 = vector.broadcast %cst_19 : f32 to vector<8x16xf32>
    %72 = arith.select %70, %71, %64 : vector<8x16xi1>, vector<8x16xf32>
    %73 = tpu.concatenate %0, %1 in 0 : vector<16x32xf32>, vector<24x32xf32> -> vector<40x32xf32>
    %cst_20 = arith.constant dense<0.000000e+00> : vector<40x36xf32>
    %74 = tpu.matmul %73, %2, %cst_20 {dimension_numbers = #tpu.dot_dimension_numbers<[1], [0], [0], [1], [0, 0, 1, 1], [], []>} : vector<40x32xf32>, vector<32x36xf32>, vector<40x36xf32> -> vector<40x36xf32>
    %75 = vector.extract_strided_slice %74 {offsets = [0, 0], sizes = [16, 19], strides = [1, 1]} : vector<40x36xf32> to vector<16x19xf32>
    %76 = vector.extract_strided_slice %75 {offsets = [0, 0], sizes = [16, 16], strides = [1, 1]} : vector<16x19xf32> to vector<16x16xf32>
    %77 = vector.extract_strided_slice %75 {offsets = [0, 16], sizes = [16, 1], strides = [1, 1]} : vector<16x19xf32> to vector<16x1xf32>
    %78 = vector.extract_strided_slice %74 {offsets = [16, 19], sizes = [24, 17], strides = [1, 1]} : vector<40x36xf32> to vector<24x17xf32>
    %79 = vector.extract_strided_slice %78 {offsets = [0, 0], sizes = [24, 16], strides = [1, 1]} : vector<24x17xf32> to vector<24x16xf32>
    %80 = vector.extract_strided_slice %78 {offsets = [0, 16], sizes = [24, 1], strides = [1, 1]} : vector<24x17xf32> to vector<24x1xf32>
    %81 = tpu.transpose %80, [1, 0] : vector<24x1xf32> -> vector<1x24xf32>
    %cst_21 = arith.constant dense<0.000000e+00> : vector<8x19xf32>
    %82 = tpu.matmul %72, %75, %cst_21 {dimension_numbers = #tpu.dot_dimension_numbers<[1], [0], [0], [1], [0, 0, 1, 1], [], []>} : vector<8x16xf32>, vector<16x19xf32>, vector<8x19xf32> -> vector<8x19xf32>
    %cst_22 = arith.constant dense<0.000000e+00> : vector<8x16xf32>
    %83 = tpu.matmul %72, %4, %cst_22 {dimension_numbers = #tpu.dot_dimension_numbers<[1], [0], [0], [1], [0, 0, 1, 1], [], []>} : vector<8x16xf32>, vector<16x16xf32>, vector<8x16xf32> -> vector<8x16xf32>
    %cst_23 = arith.constant dense<0.000000e+00> : vector<8x16xf32>
    %84 = tpu.matmul %72, %5, %cst_23 {dimension_numbers = #tpu.dot_dimension_numbers<[1], [0], [0], [1], [0, 0, 1, 1], [], []>} : vector<8x16xf32>, vector<16x16xf32>, vector<8x16xf32> -> vector<8x16xf32>
    %85 = vector.extract_strided_slice %82 {offsets = [0, 0], sizes = [8, 16], strides = [1, 1]} : vector<8x19xf32> to vector<8x16xf32>
    %86 = vector.extract_strided_slice %82 {offsets = [0, 17], sizes = [8, 1], strides = [1, 1]} : vector<8x19xf32> to vector<8x1xf32>
    %cst_24 = arith.constant 0.000000e+00 : f32
    %87 = vector.broadcast %cst_24 : f32 to vector<8x1xf32>
    %88 = arith.cmpf ogt, %86, %87 : vector<8x1xf32>
    %cst_25 = arith.constant 2.000000e-01 : f32
    %89 = vector.broadcast %cst_25 : f32 to vector<8x1xf32>
    %90 = arith.mulf %89, %86 : vector<8x1xf32>
    %91 = arith.select %88, %86, %90 : vector<8x1xi1>, vector<8x1xf32>
    %92 = math.exp %91 : vector<8x1xf32>
    %93 = vector.extract_strided_slice %82 {offsets = [0, 18], sizes = [8, 1], strides = [1, 1]} : vector<8x19xf32> to vector<8x1xf32>
    %cst_26 = arith.constant 0.000000e+00 : f32
    %94 = vector.broadcast %cst_26 : f32 to vector<8x1xf32>
    %95 = arith.cmpf ogt, %93, %94 : vector<8x1xf32>
    %cst_27 = arith.constant 2.000000e-01 : f32
    %96 = vector.broadcast %cst_27 : f32 to vector<8x1xf32>
    %97 = arith.mulf %96, %93 : vector<8x1xf32>
    %98 = arith.select %95, %93, %97 : vector<8x1xi1>, vector<8x1xf32>
    %99 = math.exp %98 : vector<8x1xf32>
    %100 = vector.broadcast %77 : vector<16x1xf32> to vector<16x24xf32>
    %101 = vector.broadcast %81 : vector<1x24xf32> to vector<16x24xf32>
    %102 = arith.addf %100, %101 : vector<16x24xf32>
    %cst_28 = arith.constant 0.000000e+00 : f32
    %103 = vector.broadcast %cst_28 : f32 to vector<16x24xf32>
    %104 = arith.cmpf ogt, %102, %103 : vector<16x24xf32>
    %cst_29 = arith.constant 2.000000e-01 : f32
    %105 = vector.broadcast %cst_29 : f32 to vector<16x24xf32>
    %106 = arith.mulf %105, %102 : vector<16x24xf32>
    %107 = arith.select %104, %102, %106 : vector<16x24xi1>, vector<16x24xf32>
    %cst_30 = arith.constant 0.000000e+00 : f32
    %108 = vector.broadcast %cst_30 : f32 to vector<16x24xf32>
    %109 = arith.cmpf ogt, %3, %108 : vector<16x24xf32>
    %cst_31 = arith.constant -9.000000e+15 : f32
    %110 = vector.broadcast %cst_31 : f32 to vector<16x24xf32>
    %111 = arith.select %109, %107, %110 : vector<16x24xi1>, vector<16x24xf32>
    %cst_32 = arith.constant dense<0xFF800000> : vector<16xf32>
    %112 = vector.multi_reduction <maximumf>, %111, %cst_32 [1] : vector<16x24xf32> to vector<16xf32>
    %113 = vector.shape_cast %112 : vector<16xf32> to vector<16x1xf32>
    %114 = vector.broadcast %113 : vector<16x1xf32> to vector<16x24xf32>
    %115 = arith.subf %111, %114 : vector<16x24xf32>
    %116 = math.exp %115 : vector<16x24xf32>
    %cst_33 = arith.constant dense<0.000000e+00> : vector<16xf32>
    %117 = vector.multi_reduction <add>, %116, %cst_33 [1] : vector<16x24xf32> to vector<16xf32>
    %118 = vector.shape_cast %117 : vector<16xf32> to vector<16x1xf32>
    %119 = tpu.reciprocal %118 {approx = true} : vector<16x1xf32> -> vector<16x1xf32>
    %120 = vector.broadcast %119 : vector<16x1xf32> to vector<16x24xf32>
    %121 = arith.mulf %116, %120 : vector<16x24xf32>
    %cst_34 = arith.constant 0.000000e+00 : f32
    %122 = vector.broadcast %cst_34 : f32 to vector<8x16xf32>
    %123 = arith.cmpf ogt, %83, %122 : vector<8x16xf32>
    %cst_35 = arith.constant 0.000000e+00 : f32
    %124 = vector.shape_cast %92 : vector<8x1xf32> to vector<8x1xf32>
    %125 = vector.broadcast %124 : vector<8x1xf32> to vector<8x16xf32>
    %126 = vector.broadcast %cst_35 : f32 to vector<8x16xf32>
    %127 = arith.select %123, %125, %126 : vector<8x16xi1>, vector<8x16xf32>
    %cst_36 = arith.constant 0.000000e+00 : f32
    %128 = vector.broadcast %cst_36 : f32 to vector<8x16xf32>
    %129 = arith.cmpf ogt, %84, %128 : vector<8x16xf32>
    %cst_37 = arith.constant 0.000000e+00 : f32
    %130 = vector.shape_cast %99 : vector<8x1xf32> to vector<8x1xf32>
    %131 = vector.broadcast %130 : vector<8x1xf32> to vector<8x16xf32>
    %132 = vector.broadcast %cst_37 : f32 to vector<8x16xf32>
    %133 = arith.select %129, %131, %132 : vector<8x16xi1>, vector<8x16xf32>
    %cst_38 = arith.constant dense<0.000000e+00> : vector<8x24xf32>
    %134 = tpu.matmul %72, %121, %cst_38 {dimension_numbers = #tpu.dot_dimension_numbers<[1], [0], [0], [1], [0, 0, 1, 1], [], []>} : vector<8x16xf32>, vector<16x24xf32>, vector<8x24xf32> -> vector<8x24xf32>
    %cst_39 = arith.constant dense<0.000000e+00> : vector<8xf32>
    %135 = vector.multi_reduction <add>, %127, %cst_39 [1] : vector<8x16xf32> to vector<8xf32>
    %136 = vector.shape_cast %135 : vector<8xf32> to vector<8x1xf32>
    %cst_40 = arith.constant dense<0.000000e+00> : vector<8xf32>
    %137 = vector.multi_reduction <add>, %133, %cst_40 [1] : vector<8x16xf32> to vector<8xf32>
    %138 = vector.shape_cast %137 : vector<8xf32> to vector<8x1xf32>
    %139 = arith.addf %136, %138 : vector<8x1xf32>
    %140 = math.exp %134 : vector<8x24xf32>
    %cst_41 = arith.constant dense<0.000000e+00> : vector<8xf32>
    %141 = vector.multi_reduction <add>, %140, %cst_41 [1] : vector<8x24xf32> to vector<8xf32>
    %142 = vector.shape_cast %141 : vector<8xf32> to vector<8x1xf32>
    %143 = arith.addf %139, %142 : vector<8x1xf32>
    %144 = arith.addf %127, %133 : vector<8x16xf32>
    %145 = tpu.reciprocal %143 {approx = true} : vector<8x1xf32> -> vector<8x1xf32>
    %146 = vector.broadcast %145 : vector<8x1xf32> to vector<8x16xf32>
    %147 = arith.mulf %144, %146 : vector<8x16xf32>
    %cst_42 = arith.constant dense<0.000000e+00> : vector<16x16xf32>
    %148 = tpu.matmul %121, %79, %cst_42 {dimension_numbers = #tpu.dot_dimension_numbers<[1], [0], [0], [1], [0, 0, 1, 1], [], []>} : vector<16x24xf32>, vector<24x16xf32>, vector<16x16xf32> -> vector<16x16xf32>
    %149 = tpu.transpose %147, [1, 0] : vector<8x16xf32> -> vector<16x8xf32>
    %cst_43 = arith.constant dense<0.000000e+00> : vector<16x16xf32>
    %150 = tpu.matmul %149, %85, %cst_43 {dimension_numbers = #tpu.dot_dimension_numbers<[1], [0], [0], [1], [0, 0, 1, 1], [], []>} : vector<16x8xf32>, vector<8x16xf32>, vector<16x16xf32> -> vector<16x16xf32>
    %151 = arith.addf %148, %150 : vector<16x16xf32>
    %cst_44 = arith.constant 0.000000e+00 : f32
    %152 = vector.broadcast %cst_44 : f32 to vector<16x16xf32>
    %153 = arith.cmpf ogt, %151, %152 : vector<16x16xf32>
    %cst_45 = arith.constant 2.000000e-01 : f32
    %154 = vector.broadcast %cst_45 : f32 to vector<16x16xf32>
    %155 = arith.mulf %154, %151 : vector<16x16xf32>
    %156 = arith.select %153, %151, %155 : vector<16x16xi1>, vector<16x16xf32>
    %157 = tpu.transpose %76, [1, 0] : vector<16x16xf32> -> vector<16x16xf32>
    %cst_46 = arith.constant dense<0.000000e+00> : vector<16x24xf32>
    %158 = tpu.matmul %157, %121, %cst_46 {dimension_numbers = #tpu.dot_dimension_numbers<[1], [0], [0], [1], [0, 0, 1, 1], [], []>} : vector<16x16xf32>, vector<16x24xf32>, vector<16x24xf32> -> vector<16x24xf32>
    %cst_47 = arith.constant 0.000000e+00 : f32
    %159 = vector.broadcast %cst_47 : f32 to vector<16x24xf32>
    %160 = arith.cmpf ogt, %158, %159 : vector<16x24xf32>
    %cst_48 = arith.constant 2.000000e-01 : f32
    %161 = vector.broadcast %cst_48 : f32 to vector<16x24xf32>
    %162 = arith.mulf %161, %158 : vector<16x24xf32>
    %163 = arith.select %160, %158, %162 : vector<16x24xi1>, vector<16x24xf32>
    %cst_49 = arith.constant dense<0.000000e+00> : vector<16x24xf32>
    %164 = tpu.matmul %156, %163, %cst_49 {dimension_numbers = #tpu.dot_dimension_numbers<[1], [0], [0], [1], [0, 0, 1, 1], [], []>} : vector<16x16xf32>, vector<16x24xf32>, vector<16x24xf32> -> vector<16x24xf32>
    %cst_50 = arith.constant 0.999989986 : f32
    %165 = vector.broadcast %cst_50 : f32 to vector<16x24xf32>
    %166 = arith.mulf %164, %165 : vector<16x24xf32>
    %cst_51 = arith.constant 0.000000e+00 : f32
    %167 = vector.broadcast %cst_51 : f32 to vector<16x24xf32>
    %168 = arith.cmpf ogt, %166, %167 : vector<16x24xf32>
    %cst_52 = arith.constant 0.000000e+00 : f32
    %169 = vector.broadcast %cst_52 : f32 to vector<16x24xf32>
    %170 = arith.minimumf %166, %169 : vector<16x24xf32>
    %171 = math.exp %170 : vector<16x24xf32>
    %cst_53 = arith.constant 1.000000e+00 : f32
    %172 = vector.broadcast %cst_53 : f32 to vector<16x24xf32>
    %173 = arith.subf %171, %172 : vector<16x24xf32>
    %174 = arith.select %168, %166, %173 : vector<16x24xi1>, vector<16x24xf32>
    %c0_54 = arith.constant 0 : index
    %c0_55 = arith.constant 0 : index
    %175 = vector.load %arg7[%c0_54, %c0_55] : memref<16x24xf32, #tpu.memory_space<vmem>>, vector<16x24xf32>
    tpu.vector_store %arg7[%c0_54, %c0_55], %174 {strides = array<i32>} : memref<16x24xf32, #tpu.memory_space<vmem>>, vector<16x24xf32>,
    return
  }
}

</mosaic_0001>

<llo_original>
// kernel: ours_layer_forward.1
$region0: #{ours_layer_forward.1}
  #allocation0 [shape = 'u32[]', space=smem, size = 0x4, offset = 0x4, fixed_abs, tag = 'smem constant byte address 0x4 - core index']
  #allocation1 [shape = 'u32[72,128]{1,0:T(1,128)}', space=vmem, size = 0x9000, scoped, tag = 'internal scratch']
  %s0 = inlined_call_operand.vmem [shape: s32[8], index: 0, kind: input, shape index: {}]
  %s1 = inlined_call_operand.hbm [shape: f32[16,32], index: 1, kind: input, shape index: {}]
  %s2 = inlined_call_operand.hbm [shape: f32[24,32], index: 2, kind: input, shape index: {}]
  %s3 = inlined_call_operand.hbm [shape: f32[32,36], index: 3, kind: input, shape index: {}]
  %s4 = inlined_call_operand.hbm [shape: f32[16,24], index: 4, kind: input, shape index: {}]
  %s5 = inlined_call_operand.hbm [shape: f32[16,16], index: 5, kind: input, shape index: {}]
  %s6 = inlined_call_operand.hbm [shape: f32[16,16], index: 6, kind: input, shape index: {}]
  %s7 = inlined_call_operand.hbm [shape: f32[16,24], index: 7, kind: output, shape index: {}]
  %s8 = sld [smem:[#allocation0]]
  $region66: #{ours_layer_forward.1} parent=0
    _
  %s10 = ssub.s32 1, %s8
  %s11 = scalar_select 0, %s10, %s8
  $region1: #{ours_layer_forward.1} parent=0
    #allocation2 [shape = 'u8[512]{0}', space=smem, size = 0x200, scoped, tag = 'input window, operand 0, single buffered']
    #allocation3 [shape = 's32[1]{0}', space=sflag, size = 0x4, scoped, tag = 'scoped memory for ours_layer_forward.1']
    #allocation4 [shape = 's32[1]{0}', space=sflag, size = 0x4, scoped, tag = 'scoped memory for ours_layer_forward.1']
    #allocation5 [shape = 's32[1]{0}', space=sflag, size = 0x4, scoped, tag = 'scoped memory for ours_layer_forward.1']
    #allocation6 [shape = 'u8[8192]{0}', space=vmem, size = 0x2000, scoped, tag = 'input window, operand 1, single buffered']
    #allocation7 [shape = 'u8[12288]{0}', space=vmem, size = 0x3000, scoped, tag = 'input window, operand 2, single buffered']
    #allocation8 [shape = 's32[1]{0}', space=sflag, size = 0x4, scoped, tag = 'scoped memory for ours_layer_forward.1']
    #allocation9 [shape = 'u8[16384]{0}', space=vmem, size = 0x4000, scoped, tag = 'input window, operand 3, single buffered']
    #allocation10 [shape = 'u8[8192]{0}', space=vmem, size = 0x2000, scoped, tag = 'input window, operand 4, single buffered']
    #allocation11 [shape = 's32[1]{0}', space=sflag, size = 0x4, scoped, tag = 'scoped memory for ours_layer_forward.1']
    #allocation12 [shape = 'u8[8192]{0}', space=vmem, size = 0x2000, scoped, tag = 'input window, operand 5, single buffered']
    #allocation13 [shape = 'u8[8192]{0}', space=vmem, size = 0x2000, scoped, tag = 'input window, operand 6, single buffered']
    #allocation14 [shape = 's32[1]{0}', space=sflag, size = 0x4, scoped, tag = 'scoped memory for ours_layer_forward.1']
    #allocation15 [shape = 'u8[8192]{0}', space=vmem, size = 0x2000, scoped, tag = 'output window, operand 0, single buffered']
    %12 = vsyncpa [#allocation5], 0
    %13 = vsyncpa [#allocation3], 0
    %14 = vsyncpa [#allocation8], 0
    %15 = vsyncpa [#allocation11], 0
    %16 = vsyncpa [#allocation14], 0
    %17 = vsyncpa [#allocation4], 0
    // Predicated region
    $region2: #{ours_layer_forward.1} parent=1 // pred_check
      _
    $region3: #{ours_layer_forward.1} parent=1 // pred_check_branch
      %19 = sbr.rel (0) target = $region5
    $region4: #{ours_layer_forward.1} parent=1 // pred_region
      %21 = vsyncadd [#allocation5], 0
      %s23 = sshll.u32 %s0, 4
      %s24 = int_to_ptr.vmem [resolvable:$true] %s23
      %26 = dma.vmem_to_smem %s24, 16, [#allocation2], [#allocation5]
    $region5: #{ours_layer_forward.1} parent=1 // pred_fallthru
      _
    // Predicated region
    $region6: #{ours_layer_forward.1} parent=1 // pred_check
      _
    $region7: #{ours_layer_forward.1} parent=1 // pred_check_branch
      %28 = sbr.rel (0) target = $region9
    $region8: #{ours_layer_forward.1} parent=1 // pred_region
      %30 = vsyncadd [#allocation3], 0
      %s31 = sshll.u32 %s1, 4
      %s32 = int_to_ptr.hbm [resolvable:$true] %s31
      %s33 = sshll.u32 [#allocation6], 4
      %s34 = int_to_ptr.vmem [resolvable:$true] %s33
      %39 = dma.hbm_to_vmem [thread:$0]  %s32, 256, %s34, [#allocation3], 128, 128, 8
    $region9: #{ours_layer_forward.1} parent=1 // pred_fallthru
      _
    // Predicated region
    $region10: #{ours_layer_forward.1} parent=1 // pred_check
      _
    $region11: #{ours_layer_forward.1} parent=1 // pred_check_branch
      %41 = sbr.rel (0) target = $region13
    $region12: #{ours_layer_forward.1} parent=1 // pred_region
      %43 = vsyncadd [#allocation8], 0
      %s44 = sshll.u32 %s2, 4
      %s45 = int_to_ptr.hbm [resolvable:$true] %s44
      %s46 = sshll.u32 [#allocation7], 4
      %s47 = int_to_ptr.vmem [resolvable:$true] %s46
      %52 = dma.hbm_to_vmem [thread:$0]  %s45, 384, %s47, [#allocation8], 128, 128, 8
    $region13: #{ours_layer_forward.1} parent=1 // pred_fallthru
      _
    // Predicated region
    $region14: #{ours_layer_forward.1} parent=1 // pred_check
      _
    $region15: #{ours_layer_forward.1} parent=1 // pred_check_branch
      %54 = sbr.rel (0) target = $region17
    $region16: #{ours_layer_forward.1} parent=1 // pred_region
      %56 = vsyncadd [#allocation8], 0
      %s57 = sshll.u32 %s3, 4
      %s58 = int_to_ptr.hbm [resolvable:$true] %s57
      %s59 = sshll.u32 [#allocation9], 4
      %s60 = int_to_ptr.vmem [resolvable:$true] %s59
      %65 = dma.hbm_to_vmem [thread:$0]  %s58, 512, %s60, [#allocation8], 128, 128, 8
    $region17: #{ours_layer_forward.1} parent=1 // pred_fallthru
      _
    // Predicated region
    $region18: #{ours_layer_forward.1} parent=1 // pred_check
      _
    $region19: #{ours_layer_forward.1} parent=1 // pred_check_branch
      %67 = sbr.rel (0) target = $region21
    $region20: #{ours_layer_forward.1} parent=1 // pred_region
      %69 = vsyncadd [#allocation11], 0
      %s70 = sshll.u32 %s4, 4
      %s71 = int_to_ptr.hbm [resolvable:$true] %s70
      %s72 = sshll.u32 [#allocation10], 4
      %s73 = int_to_ptr.vmem [resolvable:$true] %s72
      %78 = dma.hbm_to_vmem [thread:$0]  %s71, 256, %s73, [#allocation11], 128, 128, 8
    $region21: #{ours_layer_forward.1} parent=1 // pred_fallthru
      _
    // Predicated region
    $region22: #{ours_layer_forward.1} parent=1 // pred_check
      _
    $region23: #{ours_layer_forward.1} parent=1 // pred_check_branch
      %80 = sbr.rel (0) target = $region25
    $region24: #{ours_layer_forward.1} parent=1 // pred_region
      %82 = vsyncadd [#allocation11], 0
      %s83 = sshll.u32 %s5, 4
      %s84 = int_to_ptr.hbm [resolvable:$true] %s83
      %s85 = sshll.u32 [#allocation12], 4
      %s86 = int_to_ptr.vmem [resolvable:$true] %s85
      %91 = dma.hbm_to_vmem [thread:$0]  %s84, 256, %s86, [#allocation11], 128, 128, 8
    $region25: #{ours_layer_forward.1} parent=1 // pred_fallthru
      _
    // Predicated region
    $region26: #{ours_layer_forward.1} parent=1 // pred_check
      _
    $region27: #{ours_layer_forward.1} parent=1 // pred_check_branch
      %93 = sbr.rel (0) target = $region29
    $region28: #{ours_layer_forward.1} parent=1 // pred_region
      %95 = vsyncadd [#allocation14], 0
      %s96 = sshll.u32 %s6, 4
      %s97 = int_to_ptr.hbm [resolvable:$true] %s96
      %s98 = sshll.u32 [#allocation13], 4
      %s99 = int_to_ptr.vmem [resolvable:$true] %s98
      %104 = dma.hbm_to_vmem [thread:$0]  %s97, 256, %s99, [#allocation14], 128, 128, 8
    $region29: #{ours_layer_forward.1} parent=1 // pred_fallthru
      _
    // Predicated region
    $region30: #{ours_layer_forward.1} parent=1 // pred_check
      _
    $region31: #{ours_layer_forward.1} parent=1 // pred_check_branch
      %106 = sbr.rel (0) target = $region33
    $region32: #{ours_layer_forward.1} parent=1 // pred_region
      %108 = dma.done [#allocation5], 16
    $region33: #{ours_layer_forward.1} parent=1 // pred_fallthru
      _
    // Predicated region
    $region34: #{ours_layer_forward.1} parent=1 // pred_check
      _
    $region35: #{ours_layer_forward.1} parent=1 // pred_check_branch
      %110 = sbr.rel (0) target = $region37
    $region36: #{ours_layer_forward.1} parent=1 // pred_region
      %112 = dma.done [#allocation3], 256
    $region37: #{ours_layer_forward.1} parent=1 // pred_fallthru
      _
    // Predicated region
    $region38: #{ours_layer_forward.1} parent=1 // pred_check
      _
    $region39: #{ours_layer_forward.1} parent=1 // pred_check_branch
      %114 = sbr.rel (0) target = $region41
    $region40: #{ours_layer_forward.1} parent=1 // pred_region
      %116 = dma.done [#allocation8], 384
    $region41: #{ours_layer_forward.1} parent=1 // pred_fallthru
      _
    // Predicated region
    $region42: #{ours_layer_forward.1} parent=1 // pred_check
      _
    $region43: #{ours_layer_forward.1} parent=1 // pred_check_branch
      %118 = sbr.rel (0) target = $region45
    $region44: #{ours_layer_forward.1} parent=1 // pred_region
      %120 = dma.done [#allocation8], 512
    $region45: #{ours_layer_forward.1} parent=1 // pred_fallthru
      _
    // Predicated region
    $region46: #{ours_layer_forward.1} parent=1 // pred_check
      _
    $region47: #{ours_layer_forward.1} parent=1 // pred_check_branch
      %122 = sbr.rel (0) target = $region49
    $region48: #{ours_layer_forward.1} parent=1 // pred_region
      %124 = dma.done [#allocation11], 256
    $region49: #{ours_layer_forward.1} parent=1 // pred_fallthru
      _
    // Predicated region
    $region50: #{ours_layer_forward.1} parent=1 // pred_check
      _
    $region51: #{ours_layer_forward.1} parent=1 // pred_check_branch
      %126 = sbr.rel (0) target = $region53
    $region52: #{ours_layer_forward.1} parent=1 // pred_region
      %128 = dma.done [#allocation11], 256
    $region53: #{ours_layer_forward.1} parent=1 // pred_fallthru
      _
    // Predicated region
    $region54: #{ours_layer_forward.1} parent=1 // pred_check
      _
    $region55: #{ours_layer_forward.1} parent=1 // pred_check_branch
      %130 = sbr.rel (0) target = $region57
    $region56: #{ours_layer_forward.1} parent=1 // pred_region
      %132 = dma.done [#allocation14], 256
    $region57: #{ours_layer_forward.1} parent=1 // pred_fallthru
      _
    %133 = sfence
    %v134 = vld [vmem:[#allocation6] sm:$0xff]
    %v135 = vld [vmem:[#allocation6 + $0x8] sm:$0xff]
    %v136 = vld [vmem:[#allocation7] sm:$0xff]
    %v137 = vld [vmem:[#allocation7 + $0x8] sm:$0xff]
    %v138 = vld [vmem:[#allocation7 + $0x10] sm:$0xff]
    %v139 = vld [vmem:[#allocation9] sm:$0xff]
    %v140 = vld [vmem:[#allocation9 + $0x8] sm:$0xff]
    %v141 = vld [vmem:[#allocation9 + $0x10] sm:$0xff]
    %v142 = vld [vmem:[#allocation9 + $0x18] sm:$0xff]
    %v143 = vld [vmem:[#allocation10] sm:$0xff]
    %v144 = vld [vmem:[#allocation10 + $0x8] sm:$0xff]
    %v145 = vld [vmem:[#allocation12] sm:$0xff]
    %v146 = vld [vmem:[#allocation12 + $0x8] sm:$0xff]
    %v147 = vld [vmem:[#allocation13] sm:$0xff]
    %v148 = vld [vmem:[#allocation13 + $0x8] sm:$0xff]
    %v149 = vlaneseq
    %v150 = vshrl.u32 %v149, 7
    %v151 = vlaneseq
    %v152 = vand.u32 %v151, 127
    %vm153 = vcmp.eq.s32.totalorder %v150, 0
    %s154 = sld [smem:[#allocation2]]
    %v155 = vstv %s154
    %vm156 = vcmp.eq.s32.totalorder %v152, %v155
    %vm157 = vmand %vm153, %vm156
    %v158 = vsel %vm157, 1.0, 0.0
    %vm159 = vcmp.eq.s32.totalorder %v150, 1
    %s160 = sld [smem:[#allocation2 + $0x1]]
    %v161 = vstv %s160
    %vm162 = vcmp.eq.s32.totalorder %v152, %v161
    %vm163 = vmand %vm159, %vm162
    %v164 = vsel %vm163, 1.0, %v158
    %vm165 = vcmp.eq.s32.totalorder %v150, 2
    %s166 = sld [smem:[#allocation2 + $0x2]]
    %v167 = vstv %s166
    %vm168 = vcmp.eq.s32.totalorder %v152, %v167
    %vm169 = vmand %vm165, %vm168
    %v170 = vsel %vm169, 1.0, %v164
    %vm171 = vcmp.eq.s32.totalorder %v150, 3
    %s172 = sld [smem:[#allocation2 + $0x3]]
    %v173 = vstv %s172
    %vm174 = vcmp.eq.s32.totalorder %v152, %v173
    %vm175 = vmand %vm171, %vm174
    %v176 = vsel %vm175, 1.0, %v170
    %vm177 = vcmp.eq.s32.totalorder %v150, 4
    %s178 = sld [smem:[#allocation2 + $0x4]]
    %v179 = vstv %s178
    %vm180 = vcmp.eq.s32.totalorder %v152, %v179
    %vm181 = vmand %vm177, %vm180
    %v182 = vsel %vm181, 1.0, %v176
    %vm183 = vcmp.eq.s32.totalorder %v150, 5
    %s184 = sld [smem:[#allocation2 + $0x5]]
    %v185 = vstv %s184
    %vm186 = vcmp.eq.s32.totalorder %v152, %v185
    %vm187 = vmand %vm183, %vm186
    %v188 = vsel %vm187, 1.0, %v182
    %vm189 = vcmp.eq.s32.totalorder %v150, 6
    %s190 = sld [smem:[#allocation2 + $0x6]]
    %v191 = vstv %s190
    %vm192 = vcmp.eq.s32.totalorder %v152, %v191
    %vm193 = vmand %vm189, %vm192
    %v194 = vsel %vm193, 1.0, %v188
    %vm195 = vcmp.eq.s32.totalorder %v150, 7
    %s196 = sld [smem:[#allocation2 + $0x7]]
    %v197 = vstv %s196
    %vm198 = vcmp.eq.s32.totalorder %v152, %v197
    %vm199 = vmand %vm195, %vm198
    %v200 = vsel %vm199, 1.0, %v194
    %vm201 = vcmask 261120
    %v203 = vsel %vm201, %v134, 0
    %v206 = vsel %vm201, %v135, 0
    %v209 = vsel %vm201, %v136, 0
    %v212 = vsel %vm201, %v137, 0
    %v215 = vsel %vm201, %v138, 0
    %217 = vmatpush.msra.mxu0 0.0
    %218 = vmatpush.msra.mxu0 0.0
    %219 = vmatpush.msra.mxu0 0.0
    %220 = vmatpush.msra.mxu0 0.0
    %221 = vmatpush.msra.mxu0 0.0
    %222 = vmatpush.msra.mxu0 0.0
    %223 = vmatpush.msra.mxu0 0.0
    %224 = vmatpush.msra.mxu0 0.0
    %225 = vmatpush.msra.mxu0 0.0
    %226 = vmatpush.msra.mxu0 0.0
    %227 = vmatpush.msra.mxu0 0.0
    %228 = vmatpush.msra.mxu0 0.0
    %229 = vmatpush.msra.mxu0 %v142
    %230 = vmatpush.msra.mxu0 %v141
    %231 = vmatpush.msra.mxu0 %v140
    %232 = vmatpush.msra.mxu0 %v139
    %233 = vmatmul.f32.gmra.mxu0 %v203
    %v234 = vpop.f32.mrf.mxu0
    %v235 = vadd.f32 0.0, %v234
    %236 = vmatmul.f32.gmra.mxu0 %v206
    %v237 = vpop.f32.mrf.mxu0
    %v238 = vadd.f32 0.0, %v237
    %239 = vmatmul.f32.gmra.mxu0 %v209
    %v240 = vpop.f32.mrf.mxu0
    %v241 = vadd.f32 0.0, %v240
    %242 = vmatmul.f32.gmra.mxu0 %v212
    %v243 = vpop.f32.mrf.mxu0
    %v244 = vadd.f32 0.0, %v243
    %245 = vmatmul.f32.gmra.mxu0 %v215
    %v246 = vpop.f32.mrf.mxu0
    %v247 = vadd.f32 0.0, %v246
    %248 = vdwg.mxu0
    %252 = vrot.lane.b32.xlu0 %v241, 93
    %v253 = vpop.permute.xlu0 %252
    %254 = vrot.lane.b32.xlu0 %v244, 93
    %v255 = vpop.permute.xlu0 %254
    %256 = vrot.lane.b32.xlu0 %v247, 93
    %v257 = vpop.permute.xlu0 %256
    %261 = vxpose.xlu0.b32.start [1/16] %v253, 128
    %262 = vxpose.xlu0.b32.cont [2/16] %v255, 128
    %263 = vxpose.xlu0.b32.cont [3/16] %v257, 128
    %264 = vxpose.xlu0.b32.cont [4/16] 0.0, 128
    %265 = vxpose.xlu0.b32.cont [5/16] 0.0, 128
    %266 = vxpose.xlu0.b32.cont [6/16] 0.0, 128
    %267 = vxpose.xlu0.b32.cont [7/16] 0.0, 128
    %268 = vxpose.xlu0.b32.cont [8/16] 0.0, 128
    %269 = vxpose.xlu0.b32.cont [9/16] 0.0, 128
    %270 = vxpose.xlu0.b32.cont [10/16] 0.0, 128
    %271 = vxpose.xlu0.b32.cont [11/16] 0.0, 128
    %272 = vxpose.xlu0.b32.cont [12/16] 0.0, 128
    %273 = vxpose.xlu0.b32.cont [13/16] 0.0, 128
    %274 = vxpose.xlu0.b32.cont [14/16] 0.0, 128
    %275 = vxpose.xlu0.b32.cont [15/16] 0.0, 128
    %276 = vxpose.xlu0.b32.end [16/16] 0.0, 128
    %v277 = vpop.trf.xlu0
    %v278 = vpop.trf.xlu0
    %v279 = vpop.trf.xlu0
    %v280 = vpop.trf.xlu0
    %v281 = vpop.trf.xlu0
    %v282 = vpop.trf.xlu0
    %v283 = vpop.trf.xlu0
    %v284 = vpop.trf.xlu0
    %v285 = vpop.trf.xlu0
    %v286 = vpop.trf.xlu0
    %v287 = vpop.trf.xlu0
    %v288 = vpop.trf.xlu0
    %v289 = vpop.trf.xlu0
    %v290 = vpop.trf.xlu0
    %v291 = vpop.trf.xlu0
    %v292 = vpop.trf.xlu0
    %vm293 = vcmask 130048
    %v295 = vsel %vm293, %v200, 0
    %297 = vmatpush.msra.mxu0 0.0
    %298 = vmatpush.msra.mxu0 0.0
    %299 = vmatpush.msra.mxu0 0.0
    %300 = vmatpush.msra.mxu0 0.0
    %301 = vmatpush.msra.mxu0 0.0
    %302 = vmatpush.msra.mxu0 0.0
    %303 = vmatpush.msra.mxu0 0.0
    %304 = vmatpush.msra.mxu0 0.0
    %305 = vmatpush.msra.mxu0 0.0
    %306 = vmatpush.msra.mxu0 0.0
    %307 = vmatpush.msra.mxu0 0.0
    %308 = vmatpush.msra.mxu0 0.0
    %309 = vmatpush.msra.mxu0 0.0
    %310 = vmatpush.msra.mxu0 0.0
    %311 = vmatpush.msra.mxu0 %v238
    %312 = vmatpush.msra.mxu0 %v235
    %313 = vmatmul.f32.gmra.mxu0 %v295
    %v314 = vpop.f32.mrf.mxu0
    %v315 = vadd.f32 0.0, %v314
    %316 = vdwg.mxu0
    %317 = vmatpush.msra.mxu0 0.0
    %318 = vmatpush.msra.mxu0 0.0
    %319 = vmatpush.msra.mxu0 0.0
    %320 = vmatpush.msra.mxu0 0.0
    %321 = vmatpush.msra.mxu0 0.0
    %322 = vmatpush.msra.mxu0 0.0
    %323 = vmatpush.msra.mxu0 0.0
    %324 = vmatpush.msra.mxu0 0.0
    %325 = vmatpush.msra.mxu0 0.0
    %326 = vmatpush.msra.mxu0 0.0
    %327 = vmatpush.msra.mxu0 0.0
    %328 = vmatpush.msra.mxu0 0.0
    %329 = vmatpush.msra.mxu0 0.0
    %330 = vmatpush.msra.mxu0 0.0
    %331 = vmatpush.msra.mxu0 %v146
    %332 = vmatpush.msra.mxu0 %v145
    %333 = vmatmul.f32.gmra.mxu0 %v295
    %v334 = vpop.f32.mrf.mxu0
    %v335 = vadd.f32 0.0, %v334
    %336 = vdwg.mxu0
    %337 = vmatpush.msra.mxu0 0.0
    %338 = vmatpush.msra.mxu0 0.0
    %339 = vmatpush.msra.mxu0 0.0
    %340 = vmatpush.msra.mxu0 0.0
    %341 = vmatpush.msra.mxu0 0.0
    %342 = vmatpush.msra.mxu0 0.0
    %343 = vmatpush.msra.mxu0 0.0
    %344 = vmatpush.msra.mxu0 0.0
    %345 = vmatpush.msra.mxu0 0.0
    %346 = vmatpush.msra.mxu0 0.0
    %347 = vmatpush.msra.mxu0 0.0
    %348 = vmatpush.msra.mxu0 0.0
    %349 = vmatpush.msra.mxu0 0.0
    %350 = vmatpush.msra.mxu0 0.0
    %351 = vmatpush.msra.mxu0 %v148
    %352 = vmatpush.msra.mxu0 %v147
    %353 = vmatmul.f32.gmra.mxu0 %v295
    %v354 = vpop.f32.mrf.mxu0
    %v355 = vadd.f32 0.0, %v354
    %356 = vdwg.mxu0
    %vm357 = vcmp.gt.f32.partialorder %v315, 0.0
    %v358 = vmul.f32 %v315, 0.2
    %v359 = vsel %vm357, %v315, %v358
    %v360 = vmul.f32 %v359, 1.442695
    %v361 = vpow.pop %v360
    %363 = vset.pattern.permute.xlu0 16
    %364 = vperm.xlu0 %363, %v235
    %v365 = vpop.permute.xlu0 %364
    %368 = vset.pattern.permute.xlu0 16
    %369 = vperm.xlu0 %368, %v238
    %v370 = vpop.permute.xlu0 %369
    %v372 = vperm.slane %v277, 0
    %v373 = vadd.f32 %v365, %v372
    %v374 = vadd.f32 %v370, %v372
    %vm375 = vcmp.gt.f32.partialorder %v373, 0.0
    %vm376 = vcmp.gt.f32.partialorder %v374, 0.0
    %v377 = vmul.f32 %v373, 0.2
    %v378 = vmul.f32 %v374, 0.2
    %v379 = vsel %vm375, %v373, %v377
    %v380 = vsel %vm376, %v374, %v378
    %vm381 = vcmp.gt.f32.partialorder %v143, 0.0
    %vm382 = vcmp.gt.f32.partialorder %v144, 0.0
    %v383 = vsel %vm381, %v379, -9e+15
    %v384 = vsel %vm382, %v380, -9e+15
    %vm385 = vcmask 195584
    %v386 = vsel %vm385, %v383, -inf
    %387 = vmax.xlane.f32.xlu0 %v386
    %v388 = vpop.xlane.xlu0 %387
    %v389 = vsel %vm385, %v384, -inf
    %390 = vmax.xlane.f32.xlu0 %v389
    %v391 = vpop.xlane.xlu0 %390
    %v392 = vsub.f32 %v383, %v388
    %v393 = vsub.f32 %v384, %v391
    %v394 = vmul.f32 %v392, 1.442695
    %v395 = vpow.pop %v394
    %v396 = vmul.f32 %v393, 1.442695
    %v397 = vpow.pop %v396
    %v398 = vsel %vm385, %v395, 0.0
    %399 = vadd.xlane.f32.xlu0 %v398
    %v400 = vpop.xlane.xlu0 %399
    %v401 = vsel %vm385, %v397, 0.0
    %402 = vadd.xlane.f32.xlu0 %v401
    %v403 = vpop.xlane.xlu0 %402
    %v404 = vrcp.pop %v400
    %v405 = vrcp.pop %v403
    %v406 = vmul.f32 %v395, %v404
    %v407 = vmul.f32 %v397, %v405
    %vm408 = vcmp.gt.f32.partialorder %v335, 0.0
    %410 = vset.pattern.permute.xlu0 17
    %411 = vperm.xlu0 %410, %v361
    %v412 = vpop.permute.xlu0 %411
    %v414 = vsel %vm408, %v412, 0.0
    %vm415 = vcmp.gt.f32.partialorder %v355, 0.0
    %416 = vset.pattern.permute.xlu0 18
    %417 = vperm.xlu0 %416, %v361
    %v418 = vpop.permute.xlu0 %417
    %v420 = vsel %vm415, %v418, 0.0
    %421 = vmatpush.msra.mxu0 0.0
    %422 = vmatpush.msra.mxu0 0.0
    %423 = vmatpush.msra.mxu0 0.0
    %424 = vmatpush.msra.mxu0 0.0
    %425 = vmatpush.msra.mxu0 0.0
    %426 = vmatpush.msra.mxu0 0.0
    %427 = vmatpush.msra.mxu0 0.0
    %428 = vmatpush.msra.mxu0 0.0
    %429 = vmatpush.msra.mxu0 0.0
    %430 = vmatpush.msra.mxu0 0.0
    %431 = vmatpush.msra.mxu0 0.0
    %432 = vmatpush.msra.mxu0 0.0
    %433 = vmatpush.msra.mxu0 0.0
    %434 = vmatpush.msra.mxu0 0.0
    %435 = vmatpush.msra.mxu0 %v407
    %436 = vmatpush.msra.mxu0 %v406
    %437 = vmatmul.f32.gmra.mxu0 %v295
    %v438 = vpop.f32.mrf.mxu0
    %v439 = vadd.f32 0.0, %v438
    %440 = vdwg.mxu0
    %v441 = vsel %vm293, %v414, 0.0
    %442 = vadd.xlane.f32.xlu0 %v441
    %v443 = vpop.xlane.xlu0 %442
    %v444 = vsel %vm293, %v420, 0.0
    %445 = vadd.xlane.f32.xlu0 %v444
    %v446 = vpop.xlane.xlu0 %445
    %v447 = vadd.f32 %v443, %v446
    %v448 = vmul.f32 %v439, 1.442695
    %v449 = vpow.pop %v448
    %v450 = vsel %vm385, %v449, 0.0
    %451 = vadd.xlane.f32.xlu0 %v450
    %v452 = vpop.xlane.xlu0 %451
    %v453 = vadd.f32 %v447, %v452
    %v454 = vadd.f32 %v414, %v420
    %v455 = vrcp.pop %v453
    %v456 = vmul.f32 %v454, %v455
    %457 = vxpose.xlu0.b32.start [1/16] %v456, 128
    %458 = vxpose.xlu0.b32.cont [2/16] 0.0, 128
    %459 = vxpose.xlu0.b32.cont [3/16] 0.0, 128
    %460 = vxpose.xlu0.b32.cont [4/16] 0.0, 128
    %461 = vxpose.xlu0.b32.cont [5/16] 0.0, 128
    %462 = vxpose.xlu0.b32.cont [6/16] 0.0, 128
    %463 = vxpose.xlu0.b32.cont [7/16] 0.0, 128
    %464 = vxpose.xlu0.b32.cont [8/16] 0.0, 128
    %465 = vxpose.xlu0.b32.cont [9/16] 0.0, 128
    %466 = vxpose.xlu0.b32.cont [10/16] 0.0, 128
    %467 = vxpose.xlu0.b32.cont [11/16] 0.0, 128
    %468 = vxpose.xlu0.b32.cont [12/16] 0.0, 128
    %469 = vxpose.xlu0.b32.cont [13/16] 0.0, 128
    %470 = vxpose.xlu0.b32.cont [14/16] 0.0, 128
    %471 = vxpose.xlu0.b32.cont [15/16] 0.0, 128
    %472 = vxpose.xlu0.b32.end [16/16] 0.0, 128
    %v473 = vpop.trf.xlu0
    %v474 = vpop.trf.xlu0
    %v475 = vpop.trf.xlu0
    %v476 = vpop.trf.xlu0
    %v477 = vpop.trf.xlu0
    %v478 = vpop.trf.xlu0
    %v479 = vpop.trf.xlu0
    %v480 = vpop.trf.xlu0
    %v481 = vpop.trf.xlu0
    %v482 = vpop.trf.xlu0
    %v483 = vpop.trf.xlu0
    %v484 = vpop.trf.xlu0
    %v485 = vpop.trf.xlu0
    %v486 = vpop.trf.xlu0
    %v487 = vpop.trf.xlu0
    %v488 = vpop.trf.xlu0
    %vm489 = vcmask 64512
    %v491 = vsel %vm489, %v473, 0
    %v494 = vsel %vm489, %v474, 0
    %496 = vmatpush.msra.mxu0 0.0
    %497 = vmatpush.msra.mxu0 0.0
    %498 = vmatpush.msra.mxu0 0.0
    %499 = vmatpush.msra.mxu0 0.0
    %500 = vmatpush.msra.mxu0 0.0
    %501 = vmatpush.msra.mxu0 0.0
    %502 = vmatpush.msra.mxu0 0.0
    %503 = vmatpush.msra.mxu0 0.0
    %504 = vmatpush.msra.mxu0 0.0
    %505 = vmatpush.msra.mxu0 0.0
    %506 = vmatpush.msra.mxu0 0.0
    %507 = vmatpush.msra.mxu0 0.0
    %508 = vmatpush.msra.mxu0 0.0
    %509 = vmatpush.msra.mxu0 0.0
    %510 = vmatpush.msra.mxu0 0.0
    %511 = vmatpush.msra.mxu0 %v315
    %512 = vmatmul.f32.gmra.mxu0 %v491
    %v513 = vpop.f32.mrf.mxu0
    %v514 = vadd.f32 0.0, %v513
    %515 = vmatmul.f32.gmra.mxu0 %v494
    %v516 = vpop.f32.mrf.mxu0
    %v517 = vadd.f32 0.0, %v516
    %518 = vdwg.mxu0
    %519 = vrot.lane.b32.xlu0 %v241, 109
    %v520 = vpop.permute.xlu0 %519
    %521 = vrot.lane.b32.xlu0 %v244, 109
    %v522 = vpop.permute.xlu0 %521
    %523 = vrot.lane.b32.xlu0 %v247, 109
    %v524 = vpop.permute.xlu0 %523
    %v529 = vsel %vm385, %v406, 0
    %v532 = vsel %vm385, %v407, 0
    %534 = vmatpush.msra.mxu0 0.0
    %535 = vmatpush.msra.mxu0 0.0
    %536 = vmatpush.msra.mxu0 0.0
    %537 = vmatpush.msra.mxu0 0.0
    %538 = vmatpush.msra.mxu0 0.0
    %539 = vmatpush.msra.mxu0 0.0
    %540 = vmatpush.msra.mxu0 0.0
    %541 = vmatpush.msra.mxu0 0.0
    %542 = vmatpush.msra.mxu0 0.0
    %543 = vmatpush.msra.mxu0 0.0
    %544 = vmatpush.msra.mxu0 0.0
    %545 = vmatpush.msra.mxu0 0.0
    %546 = vmatpush.msra.mxu0 0.0
    %547 = vmatpush.msra.mxu0 %v524
    %548 = vmatpush.msra.mxu0 %v522
    %549 = vmatpush.msra.mxu0 %v520
    %550 = vmatmul.f32.gmra.mxu0 %v529
    %v551 = vpop.f32.mrf.mxu0
    %v552 = vadd.f32 %v514, %v551
    %553 = vmatmul.f32.gmra.mxu0 %v532
    %v554 = vpop.f32.mrf.mxu0
    %v555 = vadd.f32 %v517, %v554
    %556 = vdwg.mxu0
    %vm557 = vcmp.gt.f32.partialorder %v552, 0.0
    %vm558 = vcmp.gt.f32.partialorder %v555, 0.0
    %v559 = vmul.f32 %v552, 0.2
    %v560 = vmul.f32 %v555, 0.2
    %v561 = vsel %vm557, %v552, %v559
    %v562 = vsel %vm558, %v555, %v560
    %563 = vxpose.xlu0.b32.start [1/16] %v235, 128
    %564 = vxpose.xlu0.b32.cont [2/16] %v238, 128
    %565 = vxpose.xlu0.b32.cont [3/16] 0.0, 128
    %566 = vxpose.xlu0.b32.cont [4/16] 0.0, 128
    %567 = vxpose.xlu0.b32.cont [5/16] 0.0, 128
    %568 = vxpose.xlu0.b32.cont [6/16] 0.0, 128
    %569 = vxpose.xlu0.b32.cont [7/16] 0.0, 128
    %570 = vxpose.xlu0.b32.cont [8/16] 0.0, 128
    %571 = vxpose.xlu0.b32.cont [9/16] 0.0, 128
    %572 = vxpose.xlu0.b32.cont [10/16] 0.0, 128
    %573 = vxpose.xlu0.b32.cont [11/16] 0.0, 128
    %574 = vxpose.xlu0.b32.cont [12/16] 0.0, 128
    %575 = vxpose.xlu0.b32.cont [13/16] 0.0, 128
    %576 = vxpose.xlu0.b32.cont [14/16] 0.0, 128
    %577 = vxpose.xlu0.b32.cont [15/16] 0.0, 128
    %578 = vxpose.xlu0.b32.end [16/16] 0.0, 128
    %v579 = vpop.trf.xlu0
    %v580 = vpop.trf.xlu0
    %v581 = vpop.trf.xlu0
    %v582 = vpop.trf.xlu0
    %v583 = vpop.trf.xlu0
    %v584 = vpop.trf.xlu0
    %v585 = vpop.trf.xlu0
    %v586 = vpop.trf.xlu0
    %v587 = vpop.trf.xlu0
    %v588 = vpop.trf.xlu0
    %v589 = vpop.trf.xlu0
    %v590 = vpop.trf.xlu0
    %v591 = vpop.trf.xlu0
    %v592 = vpop.trf.xlu0
    %v593 = vpop.trf.xlu0
    %v594 = vpop.trf.xlu0
    %v596 = vsel %vm293, %v579, 0
    %v599 = vsel %vm293, %v580, 0
    %601 = vmatpush.msra.mxu0 0.0
    %602 = vmatpush.msra.mxu0 0.0
    %603 = vmatpush.msra.mxu0 0.0
    %604 = vmatpush.msra.mxu0 0.0
    %605 = vmatpush.msra.mxu0 0.0
    %606 = vmatpush.msra.mxu0 0.0
    %607 = vmatpush.msra.mxu0 0.0
    %608 = vmatpush.msra.mxu0 0.0
    %609 = vmatpush.msra.mxu0 0.0
    %610 = vmatpush.msra.mxu0 0.0
    %611 = vmatpush.msra.mxu0 0.0
    %612 = vmatpush.msra.mxu0 0.0
    %613 = vmatpush.msra.mxu0 0.0
    %614 = vmatpush.msra.mxu0 0.0
    %615 = vmatpush.msra.mxu0 %v407
    %616 = vmatpush.msra.mxu0 %v406
    %617 = vmatmul.f32.gmra.mxu0 %v596
    %v618 = vpop.f32.mrf.mxu0
    %v619 = vadd.f32 0.0, %v618
    %620 = vmatmul.f32.gmra.mxu0 %v599
    %v621 = vpop.f32.mrf.mxu0
    %v622 = vadd.f32 0.0, %v621
    %623 = vdwg.mxu0
    %vm624 = vcmp.gt.f32.partialorder %v619, 0.0
    %vm625 = vcmp.gt.f32.partialorder %v622, 0.0
    %v626 = vmul.f32 %v619, 0.2
    %v627 = vmul.f32 %v622, 0.2
    %v628 = vsel %vm624, %v619, %v626
    %v629 = vsel %vm625, %v622, %v627
    %v631 = vsel %vm293, %v561, 0
    %v634 = vsel %vm293, %v562, 0
    %636 = vmatpush.msra.mxu0 0.0
    %637 = vmatpush.msra.mxu0 0.0
    %638 = vmatpush.msra.mxu0 0.0
    %639 = vmatpush.msra.mxu0 0.0
    %640 = vmatpush.msra.mxu0 0.0
    %641 = vmatpush.msra.mxu0 0.0
    %642 = vmatpush.msra.mxu0 0.0
    %643 = vmatpush.msra.mxu0 0.0
    %644 = vmatpush.msra.mxu0 0.0
    %645 = vmatpush.msra.mxu0 0.0
    %646 = vmatpush.msra.mxu0 0.0
    %647 = vmatpush.msra.mxu0 0.0
    %648 = vmatpush.msra.mxu0 0.0
    %649 = vmatpush.msra.mxu0 0.0
    %650 = vmatpush.msra.mxu0 %v629
    %651 = vmatpush.msra.mxu0 %v628
    %652 = vmatmul.f32.gmra.mxu0 %v631
    %v653 = vpop.f32.mrf.mxu0
    %v654 = vadd.f32 0.0, %v653
    %655 = vmatmul.f32.gmra.mxu0 %v634
    %v656 = vpop.f32.mrf.mxu0
    %v657 = vadd.f32 0.0, %v656
    %658 = vdwg.mxu0
    %v659 = vmul.f32 %v654, 0.99999
    %v660 = vmul.f32 %v657, 0.99999
    %vm661 = vcmp.gt.f32.partialorder %v659, 0.0
    %vm662 = vcmp.gt.f32.partialorder %v660, 0.0
    %v663 = vmin.f32 %v659, 0.0
    %v664 = vmin.f32 %v660, 0.0
    %v665 = vmul.f32 %v663, 1.442695
    %v666 = vpow.pop %v665
    %v667 = vmul.f32 %v664, 1.442695
    %v668 = vpow.pop %v667
    %v669 = vsub.f32 %v666, 1.0
    %v670 = vsub.f32 %v668, 1.0
    %v671 = vsel %vm661, %v659, %v669
    %v672 = vsel %vm662, %v660, %v670
    %673 = vst.msk [vmem:[#allocation15] sm:$0xff] %vm385, %v671
    %674 = vst.msk [vmem:[#allocation15 + $0x8] sm:$0xff] %vm385, %v672
    // Predicated region
    $region58: #{ours_layer_forward.1} parent=1 // pred_check
      _
    $region59: #{ours_layer_forward.1} parent=1 // pred_check_branch
      %676 = sbr.rel (0) target = $region61
    $region60: #{ours_layer_forward.1} parent=1 // pred_region
      %678 = vsyncadd [#allocation4], 0
      %s679 = sshll.u32 [#allocation15], 4
      %s680 = int_to_ptr.vmem [resolvable:$true] %s679
      %s681 = sshll.u32 %s7, 4
      %s682 = int_to_ptr.hbm [resolvable:$true] %s681
      %687 = dma.vmem_to_hbm [thread:$0]  %s680, 256, %s682, [#allocation4], 128, 128, 8
    $region61: #{ours_layer_forward.1} parent=1 // pred_fallthru
      _
    // Predicated region
    $region62: #{ours_layer_forward.1} parent=1 // pred_check
      _
    $region63: #{ours_layer_forward.1} parent=1 // pred_check_branch
      %689 = sbr.rel (0) target = $region65
    $region64: #{ours_layer_forward.1} parent=1 // pred_region
      %691 = dma.done [#allocation4], 256
    $region65: #{ours_layer_forward.1} parent=1 // pred_fallthru
      _
    %692 = vsyncpa [#allocation3], 1
    %693 = vsyncpa [#allocation8], 1
    %694 = vsyncpa [#allocation11], 1
    %695 = vsyncpa [#allocation14], 1
    %696 = vsyncpa [#allocation4], 1
    %697 = vsyncpa [#allocation5], 1

</llo_original>
